<compile_context>
chip_gen: v5e
topology: v5e:2x2
jax: 0.10.0
libtpu: 0.0.40
codegen_flags: <defaults>
</compile_context>

<pallas_src>
import functools

import numpy as np
import jax
import jax.numpy as jnp
from jax.experimental import pallas as pl
from jax.experimental.pallas import tpu as pltpu


# ----------------------------- kernels ---------------------------------------
def _ntl_window_kernel(logits_ref, y_ref, const_ref, out_ref):
    """NTL over a narrow lane window that already contains all number tokens.

    logits_ref: (TR, W) native dtype   window slice of the logits
    y_ref:      (TR, 1) f32            target digit value (0 on invalid rows)
    const_ref:  (2,  W) f32            row 0: additive bias (0 on number tokens,
                                       -1e30 elsewhere); row 1: digit values
    out_ref:    (TR, 1) f32            per-position NTL (wrapper re-masks)
    """
    logits = logits_ref[...].astype(jnp.float32)               # (TR, W)
    c = const_ref[...]                                          # (2, W)
    bias = c[0:1, :]
    vals = c[1:2, :]

    g = logits + bias                                           # -1e30 off number tokens
    m = jnp.max(g, axis=-1, keepdims=True)                      # (TR, 1)
    e = jnp.exp(g - m)                                          # exactly 0 off number tokens
    denom = jnp.sum(e, axis=-1, keepdims=True)
    numer = jnp.sum(e * jnp.abs(y_ref[...] - vals), axis=-1, keepdims=True)
    out_ref[...] = numer * pl.reciprocal(denom)                 # exact reciprocal


def _ntl_gather_kernel(logits_ref, onehot_ref, y_ref, const_ref, out_ref,
                       acc_ref, *, precision):
    """NTL with an MXU one-hot gather of scattered number-token columns.

    Grid: (row tiles [parallel], vocab chunks [arbitrary, reduction last]).
    acc_ref (TR, NT_PAD) f32 accumulates the gathered number-token logits.
    """
    k = pl.program_id(1)

    @pl.when(k == 0)
    def _init():
        acc_ref[...] = jnp.zeros_like(acc_ref)

    # One-hot gather on the MXU: only one nonzero per onehot column, so the
    # result is the gathered logit (exact with HIGHEST precision for f32).
    acc_ref[...] += jnp.dot(logits_ref[...], onehot_ref[...],
                            precision=precision,
                            preferred_element_type=jnp.float32)

    @pl.when(k == pl.num_programs(1) - 1)
    def _finalize():
        c = const_ref[...]                                      # (2, NT_PAD)
        bias = c[0:1, :]
        vals = c[1:2, :]
        g = acc_ref[...] + bias                                 # -1e30 on pad lanes
        m = jnp.max(g, axis=-1, keepdims=True)
        e = jnp.exp(g - m)
        denom = jnp.sum(e, axis=-1, keepdims=True)
        numer = jnp.sum(e * jnp.abs(y_ref[...] - vals), axis=-1, keepdims=True)
        out_ref[...] = numer * pl.reciprocal(denom)


# ----------------------------- sizing helpers ---------------------------------
def _tpu_vmem_capacity():
    """Physical VMEM bytes per core; conservative 64 MiB (v7x) fallback."""
    try:
        cap = int(pltpu.get_tpu_info().vmem_capacity_bytes)
        if cap > 0:
            return cap
    except Exception:
        pass
    return 64 << 20


def _pick_row_tile(r, per_row_bytes, fixed_bytes, budget_bytes, gran, max_rows=4096):
    """Largest row tile (multiple of the dtype sublane granularity) whose
    working set fits the budget, capped so the row grid keeps >=2 (prefer >=4)
    steps for v7x's two TensorCores."""
    def ceil_to_gran(x):
        return ((x + gran - 1) // gran) * gran

    avail = max(budget_bytes - fixed_bytes, per_row_bytes * gran)
    cap = int(avail // max(per_row_bytes, 1))
    cap = max(gran, (cap // gran) * gran)
    cap = min(cap, max_rows)

    half = max(gran, ceil_to_gran(-(-r // 2)))       # >= 2 grid steps
    quarter = max(gran, ceil_to_gran(-(-r // 4)))    # >= 4 steps, if tiles stay big
    cap = min(cap, half)
    if quarter >= 256:
        cap = min(cap, quarter)
    return max(gran, cap)


def _pick_chunk_v(v, max_chunk=1024):
    """Vocab chunk for the gather path: multiple of 128 dividing V (or V itself)."""
    if v <= max_chunk:
        return v
    for c in range(max_chunk, 127, -128):
        if v % c == 0:
            return c
    return v   # TODO(synk): no 128-multiple divisor -> single large chunk


def _vmem_limit_bytes(working_set_bytes, vmem_capacity):
    lim = int(working_set_bytes * 1.25) + (8 << 20)
    lim = max(lim, 16 << 20)
    return int(min(lim, max(vmem_capacity - (4 << 20), 16 << 20)))


# ----------------------------- wrapper ---------------------------------------
def ntl_per_position(logits, labels, number_values, is_number_token, *,
                     row_tile=None, chunk_v=None, interpret=False):
    """Returns (per_position_loss (BS,T) f32 — NOT pre-masked — and valid (BS,T) bool).

    `number_values` / `is_number_token` are tokenizer-derived buffers and must be
    concrete (they determine which kernel/tiling is built), not traced.
    """
    bs, t, v = logits.shape
    number_values = jnp.asarray(number_values)
    labels = jnp.where(labels == -100, 0, labels)
    y = number_values[labels]                                 # NaN on non-digit labels
    valid = ~jnp.isnan(y)
    y_filled = jnp.where(valid, y, 0.0).astype(jnp.float32)

    r = bs * t
    logits2d = logits.reshape(r, v)                           # native dtype, no upcast
    y2d = y_filled.reshape(r, 1)

    # Static (host-side) tokenizer metadata.
    is_num_np = np.asarray(is_number_token).astype(bool)
    vals_np = np.where(is_num_np,
                       np.nan_to_num(np.asarray(number_values, dtype=np.float32)),
                       0.0).astype(np.float32)
    num_ids = np.nonzero(is_num_np)[0]
    if num_ids.size == 0:
        raise ValueError("is_number_token selects no tokens")

    itemsize = int(jnp.dtype(logits.dtype).itemsize)
    gran = max(8, 32 // itemsize)            # sublane granularity: 8 f32 / 16 bf16 / 32 int8
    vmem_cap = _tpu_vmem_capacity()
    budget = int(vmem_cap * 0.45)            # per-generation working-set budget

    # ---- Path A: all number-token ids inside one aligned lane window --------
    lo_id, hi_id = int(num_ids.min()), int(num_ids.max())
    window = None
    if v <= 512:
        window = (0, v)                       # tiny vocab: single full-dim block
    else:
        for w_cand in (128, 256, 384, 512):
            lo_cand = (lo_id // w_cand) * w_cand
            if hi_id < lo_cand + w_cand and lo_cand + w_cand <= v:
                window = (lo_cand, w_cand)
                break

    if window is not None:
        lo, w = window
        w_pad = max(128, ((w + 127) // 128) * 128)
        bias_np = np.where(is_num_np[lo:lo + w], 0.0, -1e30).astype(np.float32)
        const = jnp.asarray(np.stack([bias_np, vals_np[lo:lo + w]], axis=0))  # (2, w)

        # logits window (double-buffered) + ~3 f32 temps + lane-padded y/out buffers
        per_row = 2 * w_pad * itemsize + 3 * w_pad * 4 + 4 * 128 * 4
        fixed = 2 * 8 * w_pad * 4                                  # resident (2,w) const
        if row_tile is None:
            row_tile = _pick_row_tile(r, per_row, fixed, budget, gran)
        win_blk = lo // w

        out = pl.pallas_call(
            _ntl_window_kernel,
            out_shape=jax.ShapeDtypeStruct((r, 1), jnp.float32),
            grid_spec=pltpu.PrefetchScalarGridSpec(
                num_scalar_prefetch=0,
                grid=(pl.cdiv(r, row_tile),),
                in_specs=[
                    pl.BlockSpec((row_tile, w), lambda i, _b=win_blk: (i, _b)),  # logit slice
                    pl.BlockSpec((row_tile, 1), lambda i: (i, 0)),               # target digit
                    pl.BlockSpec((2, w), lambda i: (0, 0)),                      # bias / values
                ],
                out_specs=pl.BlockSpec((row_tile, 1), lambda i: (i, 0)),
            ),
            compiler_params=pltpu.CompilerParams(
                dimension_semantics=("parallel",),
                vmem_limit_bytes=_vmem_limit_bytes(row_tile * per_row + fixed, vmem_cap),
            ),
            interpret=interpret,
        )(logits2d, y2d, const)

    else:
        # ---- Path B: scattered ids -> MXU one-hot gather, vocab-chunked -----
        nt = int(num_ids.size)
        nt_pad = max(128, ((nt + 127) // 128) * 128)
        if chunk_v is None:
            chunk_v = _pick_chunk_v(v)
        else:
            assert chunk_v == v or (chunk_v % 128 == 0 and v % chunk_v == 0), \
                "chunk_v must be V or a 128-multiple divisor of V"
        n_chunks = v // chunk_v if v % chunk_v == 0 else 1
        cv_pad = ((chunk_v + 127) // 128) * 128

        onehot_np = np.zeros((v, nt_pad), dtype=np.float32)
        onehot_np[num_ids, np.arange(nt)] = 1.0
        onehot = jnp.asarray(onehot_np, dtype=logits.dtype)        # MXU input dtype

        bias_np = np.full((nt_pad,), -1e30, dtype=np.float32)
        bias_np[:nt] = 0.0
        dval_np = np.zeros((nt_pad,), dtype=np.float32)
        dval_np[:nt] = vals_np[num_ids]
        const = jnp.asarray(np.stack([bias_np, dval_np], axis=0))  # (2, nt_pad)

        per_row = (2 * cv_pad * itemsize        # logits chunk, double-buffered
                   + nt_pad * 4                 # f32 accumulator scratch
                   + 3 * nt_pad * 4             # finalize temps
                   + 4 * 128 * 4)               # lane-padded y/out, double-buffered
        fixed = 2 * cv_pad * nt_pad * itemsize + 2 * 8 * nt_pad * 4
        if row_tile is None:
            row_tile = _pick_row_tile(r, per_row, fixed, budget, gran)

        precision = (jax.lax.Precision.HIGHEST
                     if logits.dtype == jnp.float32 else None)
        kernel = functools.partial(_ntl_gather_kernel, precision=precision)

        out = pl.pallas_call(
            kernel,
            out_shape=jax.ShapeDtypeStruct((r, 1), jnp.float32),
            grid_spec=pltpu.PrefetchScalarGridSpec(
                num_scalar_prefetch=0,
                grid=(pl.cdiv(r, row_tile), n_chunks),
                in_specs=[
                    pl.BlockSpec((row_tile, chunk_v), lambda i, k: (i, k)),   # logits chunk
                    pl.BlockSpec((chunk_v, nt_pad), lambda i, k: (k, 0)),     # one-hot chunk
                    pl.BlockSpec((row_tile, 1), lambda i, k: (i, 0)),         # target digit
                    pl.BlockSpec((2, nt_pad), lambda i, k: (0, 0)),           # bias / values
                ],
                out_specs=pl.BlockSpec((row_tile, 1), lambda i, k: (i, 0)),
                scratch_shapes=[pltpu.VMEM((row_tile, nt_pad), jnp.float32)],
            ),
            compiler_params=pltpu.CompilerParams(
                dimension_semantics=("parallel", "arbitrary"),
                vmem_limit_bytes=_vmem_limit_bytes(row_tile * per_row + fixed, vmem_cap),
            ),
            interpret=interpret,
        )(logits2d, onehot, y2d, const)

    per_pos = out[:, 0].reshape(bs, t)
    return per_pos, valid


def number_token_loss(logits, labels, number_values, is_number_token,
                      loss_mask=None, reduction="mean", *,
                      row_tile=None, chunk_v=None):
    per_pos, valid = ntl_per_position(logits, labels, number_values, is_number_token,
                                      row_tile=row_tile, chunk_v=chunk_v)
    if loss_mask is None:
        mask = valid.astype(per_pos.dtype)
    else:
        mask = jnp.where(valid, loss_mask.astype(per_pos.dtype), 0.0)

    if reduction == "mean":
        num = jnp.sum(per_pos * mask)
        cnt = jnp.count_nonzero(mask)
        # matches the module's "no valid positions -> 0" early return
        return jnp.where(cnt > 0, num / jnp.maximum(cnt, 1).astype(num.dtype),
                         jnp.float32(0.0))
    elif reduction == "sum":
        return jnp.sum(per_pos * mask)
    elif reduction == "none":
        return per_pos * mask
    else:
        raise ValueError(f"{reduction} is not a valid value for reduction")


# ------------------------- pure-JAX reference --------------------------------
def ref_number_token_loss(logits, labels, number_values_np, is_number_np,
                          loss_mask=None, reduction="mean"):
    num_ids = np.nonzero(is_number_np)[0]
    dense_vals = jnp.asarray(number_values_np[num_ids], dtype=jnp.float32)
    labels = jnp.where(labels == -100, 0, labels)
    y = jnp.asarray(number_values_np)[labels]
    valid = ~jnp.isnan(y)
    nt_logits = jnp.take(logits, jnp.asarray(num_ids), axis=-1)
    probs = jax.nn.softmax(nt_logits.astype(jnp.float32), axis=-1)
    abs_diff = jnp.abs(jnp.where(valid, y, 0.0)[..., None].astype(jnp.float32) - dense_vals)
    loss_pos = jnp.where(valid, jnp.sum(abs_diff * probs, axis=-1), 0.0)
    mask = valid.astype(jnp.float32) if loss_mask is None else \
        jnp.where(valid, loss_mask.astype(jnp.float32), 0.0)
    if reduction == "mean":
        cnt = jnp.count_nonzero(mask)
        return jnp.where(cnt > 0, jnp.sum(loss_pos * mask) / jnp.maximum(cnt, 1), 0.0)
    if reduction == "sum":
        return jnp.sum(loss_pos * mask)
    return loss_pos * mask


if __name__ == "__main__":
    key = jax.random.PRNGKey(0)
    (k_logits, k_labels, k_mask,
     k2_logits, k2_labels, k2_mask) = jax.random.split(key, 6)

    # ------------- Test 1: contiguous digit ids (lane-window path) ----------
    V = 32
    digit_ids = np.arange(2, 12)
    number_values_np = np.full((V,), np.nan, dtype=np.float32)
    for digit, tok_id in enumerate(digit_ids):
        number_values_np[tok_id] = float(digit)
    is_number_np = ~np.isnan(number_values_np)
    number_values = jnp.asarray(number_values_np)
    is_number_token = jnp.asarray(is_number_np)

    BS, T = 2, 8
    logits = jax.random.normal(k_logits, (BS, T, V), dtype=jnp.float32)
    labels = jax.random.randint(k_labels, (BS, T), 0, V, dtype=jnp.int32)
    labels = labels.at[0, 0].set(int(digit_ids[3]))
    labels = labels.at[0, 1].set(int(digit_ids[7]))
    labels = labels.at[1, 2].set(int(digit_ids[0]))
    labels = labels.at[1, 3].set(-100)
    loss_mask = (jax.random.uniform(k_mask, (BS, T)) > 0.3).astype(jnp.float32)

    for red in ("mean", "sum", "none"):
        got = jax.block_until_ready(
            number_token_loss(logits, labels, number_values, is_number_token,
                              loss_mask=loss_mask, reduction=red))
        want = ref_number_token_loss(logits, labels, number_values_np, is_number_np,
                                     loss_mask=loss_mask, reduction=red)
        np.testing.assert_allclose(np.asarray(got), np.asarray(want),
                                   rtol=1e-5, atol=1e-6)

    # bf16 logits stream through the same window path (f32 math in-kernel).
    logits_bf16 = logits.astype(jnp.bfloat16)
    got_bf = jax.block_until_ready(
        number_token_loss(logits_bf16, labels, number_values, is_number_token,
                          loss_mask=loss_mask, reduction="mean"))
    want_bf = ref_number_token_loss(logits_bf16, labels, number_values_np,
                                    is_number_np, loss_mask=loss_mask,
                                    reduction="mean")
    np.testing.assert_allclose(np.asarray(got_bf), np.asarray(want_bf),
                               rtol=1e-5, atol=1e-6)

    # ------------- Test 2: scattered ids (MXU one-hot gather path) ----------
    V2 = 640
    scat_ids = np.array([3, 17, 100, 200, 320, 333, 400, 450, 560, 630])
    number_values2_np = np.full((V2,), np.nan, dtype=np.float32)
    for digit, tok_id in enumerate(scat_ids):
        number_values2_np[tok_id] = float(digit)
    is_number2_np = ~np.isnan(number_values2_np)
    number_values2 = jnp.asarray(number_values2_np)
    is_number_token2 = jnp.asarray(is_number2_np)

    BS2, T2 = 2, 16
    logits2 = jax.random.normal(k2_logits, (BS2, T2, V2), dtype=jnp.float32)
    labels2 = jax.random.randint(k2_labels, (BS2, T2), 0, V2, dtype=jnp.int32)
    labels2 = labels2.at[0, 0].set(int(scat_ids[1]))
    labels2 = labels2.at[0, 5].set(int(scat_ids[9]))
    labels2 = labels2.at[1, 2].set(int(scat_ids[4]))
    labels2 = labels2.at[1, 7].set(-100)
    loss_mask2 = (jax.random.uniform(k2_mask, (BS2, T2)) > 0.3).astype(jnp.float32)

    # chunk_v=128 forces a multi-chunk vocab reduction to exercise the accumulator.
    for red in ("mean", "none"):
        got = jax.block_until_ready(
            number_token_loss(logits2, labels2, number_values2, is_number_token2,
                              loss_mask=loss_mask2, reduction=red, chunk_v=128))
        want = ref_number_token_loss(logits2, labels2, number_values2_np,
                                     is_number2_np, loss_mask=loss_mask2,
                                     reduction=red)
        np.testing.assert_allclose(np.asarray(got), np.asarray(want),
                                   rtol=1e-5, atol=1e-6)

    print("KERNEL_OK")
</pallas_src>

<mosaic_0001>
module attributes {stable_mosaic.version = 11 : i64} {
  func.func @_ntl_window_kernel(%arg0: i32, %arg1: memref<8x32xf32, #tpu.memory_space<vmem>>, %arg2: memref<8x1xf32, #tpu.memory_space<vmem>>, %arg3: memref<2x32xf32, #tpu.memory_space<vmem>>, %arg4: memref<8x1xf32, #tpu.memory_space<vmem>>) attributes {dimension_semantics = [#tpu.dimension_semantics<parallel>], iteration_bounds = array<i64: 2>, scalar_prefetch = 0 : i64, scratch_operands = 0 : i64, tpu.core_type = #tpu.core_type<tc>, window_params = [{transform_indices = @transform_0, window_bounds = array<i64: 8, 32>}, {transform_indices = @transform_1, window_bounds = array<i64: 8, 1>}, {pipeline_mode = #tpu.pipeline_mode<synchronous>, transform_indices = @transform_2, window_bounds = array<i64: 2, 32>}, {transform_indices = @transform_3, window_bounds = array<i64: 8, 1>}]} {
    %c0 = arith.constant 0 : index
    %c0_0 = arith.constant 0 : index
    %0 = vector.load %arg1[%c0, %c0_0] : memref<8x32xf32, #tpu.memory_space<vmem>>, vector<8x32xf32>
    %c0_1 = arith.constant 0 : index
    %c0_2 = arith.constant 0 : index
    %1 = vector.load %arg3[%c0_1, %c0_2] : memref<2x32xf32, #tpu.memory_space<vmem>>, vector<2x32xf32>
    %2 = vector.extract_strided_slice %1 {offsets = [0, 0], sizes = [1, 32], strides = [1, 1]} : vector<2x32xf32> to vector<1x32xf32>
    %3 = vector.extract_strided_slice %1 {offsets = [1, 0], sizes = [1, 32], strides = [1, 1]} : vector<2x32xf32> to vector<1x32xf32>
    %4 = vector.broadcast %2 : vector<1x32xf32> to vector<8x32xf32>
    %5 = arith.addf %0, %4 : vector<8x32xf32>
    %cst = arith.constant dense<0xFF800000> : vector<8xf32>
    %6 = vector.multi_reduction <maximumf>, %5, %cst [1] : vector<8x32xf32> to vector<8xf32>
    %7 = vector.shape_cast %6 : vector<8xf32> to vector<8x1xf32>
    %8 = vector.broadcast %7 : vector<8x1xf32> to vector<8x32xf32>
    %9 = arith.subf %5, %8 : vector<8x32xf32>
    %10 = math.exp %9 : vector<8x32xf32>
    %cst_3 = arith.constant dense<0.000000e+00> : vector<8xf32>
    %11 = vector.multi_reduction <add>, %10, %cst_3 [1] : vector<8x32xf32> to vector<8xf32>
    %12 = vector.shape_cast %11 : vector<8xf32> to vector<8x1xf32>
    %c0_4 = arith.constant 0 : index
    %c0_5 = arith.constant 0 : index
    %13 = vector.load %arg2[%c0_4, %c0_5] : memref<8x1xf32, #tpu.memory_space<vmem>>, vector<8x1xf32>
    %14 = vector.broadcast %13 : vector<8x1xf32> to vector<8x32xf32>
    %15 = vector.broadcast %3 : vector<1x32xf32> to vector<8x32xf32>
    %16 = arith.subf %14, %15 : vector<8x32xf32>
    %17 = math.absf %16 : vector<8x32xf32>
    %18 = arith.mulf %10, %17 : vector<8x32xf32>
    %cst_6 = arith.constant dense<0.000000e+00> : vector<8xf32>
    %19 = vector.multi_reduction <add>, %18, %cst_6 [1] : vector<8x32xf32> to vector<8xf32>
    %20 = vector.shape_cast %19 : vector<8xf32> to vector<8x1xf32>
    %21 = tpu.reciprocal %12 : vector<8x1xf32> -> vector<8x1xf32>
    %22 = arith.mulf %20, %21 : vector<8x1xf32>
    %c0_7 = arith.constant 0 : index
    %c0_8 = arith.constant 0 : index
    %23 = vector.load %arg4[%c0_7, %c0_8] : memref<8x1xf32, #tpu.memory_space<vmem>>, vector<8x1xf32>
    tpu.vector_store %arg4[%c0_7, %c0_8], %22 {strides = array<i32>} : memref<8x1xf32, #tpu.memory_space<vmem>>, vector<8x1xf32>,
    return
  }
  func.func @transform_0(%arg0: i32) -> (i32, i32) {
    %c0_i32 = arith.constant 0 : i32
    %c0_i32_0 = arith.constant 0 : i32
    return %arg0, %c0_i32 : i32, i32
  }
  func.func @transform_1(%arg0: i32) -> (i32, i32) {
    %c0_i32 = arith.constant 0 : i32
    %c0_i32_0 = arith.constant 0 : i32
    return %arg0, %c0_i32 : i32, i32
  }
  func.func @transform_2(%arg0: i32) -> (i32, i32) {
    %c0_i32 = arith.constant 0 : i32
    %c0_i32_0 = arith.constant 0 : i32
    %c0_i32_1 = arith.constant 0 : i32
    return %c0_i32, %c0_i32_0 : i32, i32
  }
  func.func @transform_3(%arg0: i32) -> (i32, i32) {
    %c0_i32 = arith.constant 0 : i32
    %c0_i32_0 = arith.constant 0 : i32
    return %arg0, %c0_i32 : i32, i32
  }
}

</mosaic_0001>

<llo_original>
// kernel: tpu_custom_call.1
$region0: #{tpu_custom_call.1}
  #allocation0 [shape = 'u32[]', space=smem, size = 0x4, offset = 0x4, fixed_abs, tag = 'smem constant byte address 0x4 - core index']
  #allocation1 [shape = 'u32[72,128]{1,0:T(1,128)}', space=vmem, size = 0x9000, scoped, tag = 'internal scratch']
  %s0 = inlined_call_operand.vmem [shape: f32[16,32], index: 0, kind: input, shape index: {}]
  %s1 = inlined_call_operand.vmem [shape: f32[16,1], index: 1, kind: input, shape index: {}]
  %s2 = inlined_call_operand.vmem [shape: f32[2,32], index: 2, kind: input, shape index: {}]
  %s3 = inlined_call_operand.vmem [shape: f32[16,1], index: 3, kind: output, shape index: {}]
  %s4 = sld [smem:[#allocation0]]
  $region45: #{tpu_custom_call.1} parent=0
    _
  %s6 = ssub.s32 1, %s4
  %s7 = scalar_select 0, %s6, %s4
  loop: start=0, step=1, limit=4
  $region2: #{tpu_custom_call.1} parent=0 // loop_pre_header
    _
  $region3: #{tpu_custom_call.1} parent=0 // loop_header
    %s9 = sphi 0, %s13
    %p10 = scmp.ge.s32.totalorder %s9, 4
    %s19 = sphi 0, %s21
    %s22 = sphi 0, %s19
    %s23 = sphi 0, %s22
    %s39 = sphi 0, %s23
    %s45 = sphi 0, %s47
    %s48 = sphi 0, %s45
    %s49 = sphi 0, %s48
    %s65 = sphi 0, %s49
    %s69 = sphi 0, %s69
    %s71 = sphi 0, %s69
    %s72 = sphi 0, %s71
    %s86 = sphi 0, %s72
    %s92 = sphi 0, %s94
    %s95 = sphi 0, %s92
    %s96 = sphi 0, %s95
    %s112 = sphi 0, %s96
  $region4: #{tpu_custom_call.1} parent=0 // loop_header_branch
    %12 = sbr.rel (%p10) target = $region8
  $region5: #{tpu_custom_call.1} parent=0 // loop_body
    %s14 = ssub.s32 %s9, 1
    %s15 = ssub.s32 %s9, 2
    %s16 = sadd.s32 %s9, 1
    %s17 = ssub.s32 %s9, %s16
    %p18 = scmp.eq.s32.totalorder %s17, 0
    %s20 = sadd.s32 %s19, 1
    %s21 = scalar_select %p18, %s19, %s20
    %p24 = pneg %p18
    %p25 = scmp.eq.s32.totalorder %s9, 1
    %p26 = por %p24, %p25
    %p27 = scmp.ne.s32.totalorder %s19, %s22
    %p28 = scmp.eq.s32.totalorder %s9, 0
    %p29 = por %p27, %p28
    %p30 = scmp.ne.s32.totalorder %s19, %s22
    %p31 = scmp.eq.s32.totalorder %s14, 1
    %p32 = por %p30, %p31
    %p33 = scmp.ne.s32.totalorder %s22, %s23
    %p34 = scmp.eq.s32.totalorder %s14, 0
    %p35 = por %p33, %p34
    %p36 = scmp.ne.s32.totalorder %s22, %s23
    %p37 = scmp.eq.s32.totalorder %s15, 1
    %p38 = por %p36, %p37
    %p40 = scmp.ne.s32.totalorder %s23, %s39
    %p41 = scmp.eq.s32.totalorder %s15, 0
    %p42 = por %p40, %p41
    %s43 = ssub.s32 %s9, %s16
    %p44 = scmp.eq.s32.totalorder %s43, 0
    %s46 = sadd.s32 %s45, 1
    %s47 = scalar_select %p44, %s45, %s46
    %p50 = pneg %p44
    %p51 = scmp.eq.s32.totalorder %s9, 1
    %p52 = por %p50, %p51
    %p53 = scmp.ne.s32.totalorder %s45, %s48
    %p54 = scmp.eq.s32.totalorder %s9, 0
    %p55 = por %p53, %p54
    %p56 = scmp.ne.s32.totalorder %s45, %s48
    %p57 = scmp.eq.s32.totalorder %s14, 1
    %p58 = por %p56, %p57
    %p59 = scmp.ne.s32.totalorder %s48, %s49
    %p60 = scmp.eq.s32.totalorder %s14, 0
    %p61 = por %p59, %p60
    %p62 = scmp.ne.s32.totalorder %s48, %s49
    %p63 = scmp.eq.s32.totalorder %s15, 1
    %p64 = por %p62, %p63
    %p66 = scmp.ne.s32.totalorder %s49, %s65
    %p67 = scmp.eq.s32.totalorder %s15, 0
    %p68 = por %p66, %p67
    %s70 = sadd.s32 %s69, 1
    %p73 = scmp.eq.s32.totalorder %s9, 1
    %p74 = scmp.ne.s32.totalorder %s69, %s71
    %p75 = scmp.eq.s32.totalorder %s9, 0
    %p76 = por %p74, %p75
    %p77 = scmp.ne.s32.totalorder %s69, %s71
    %p78 = scmp.eq.s32.totalorder %s14, 1
    %p79 = por %p77, %p78
    %p80 = scmp.ne.s32.totalorder %s71, %s72
    %p81 = scmp.eq.s32.totalorder %s14, 0
    %p82 = por %p80, %p81
    %p83 = scmp.ne.s32.totalorder %s71, %s72
    %p84 = scmp.eq.s32.totalorder %s15, 1
    %p85 = por %p83, %p84
    %p87 = scmp.ne.s32.totalorder %s72, %s86
    %p88 = scmp.eq.s32.totalorder %s15, 0
    %p89 = por %p87, %p88
    %s90 = ssub.s32 %s9, %s16
    %p91 = scmp.eq.s32.totalorder %s90, 0
    %s93 = sadd.s32 %s92, 1
    %s94 = scalar_select %p91, %s92, %s93
    %p97 = pneg %p91
    %p98 = scmp.eq.s32.totalorder %s9, 1
    %p99 = por %p97, %p98
    %p100 = scmp.ne.s32.totalorder %s92, %s95
    %p101 = scmp.eq.s32.totalorder %s9, 0
    %p102 = por %p100, %p101
    %p103 = scmp.ne.s32.totalorder %s92, %s95
    %p104 = scmp.eq.s32.totalorder %s14, 1
    %p105 = por %p103, %p104
    %p106 = scmp.ne.s32.totalorder %s95, %s96
    %p107 = scmp.eq.s32.totalorder %s14, 0
    %p108 = por %p106, %p107
    %p109 = scmp.ne.s32.totalorder %s95, %s96
    %p110 = scmp.eq.s32.totalorder %s15, 1
    %p111 = por %p109, %p110
    %p113 = scmp.ne.s32.totalorder %s96, %s112
    %p114 = scmp.eq.s32.totalorder %s15, 0
    %p115 = por %p113, %p114
    %p116 = scmp.le.s32.totalorder 1, %s9
    %p117 = scmp.lt.s32.totalorder %s9, 3
    %p118 = pnand %p116, %p117
    %p119 = pneg %p118
    // Predicated region
    $region9: #{tpu_custom_call.1} parent=5 // pred_check
      _
    $region10: #{tpu_custom_call.1} parent=5 // pred_check_branch
      %121 = sbr.rel (%p118) target = $region12
    $region11: #{tpu_custom_call.1} parent=5 // pred_region
      %s122 = ssub.s32 %s9, 1
      // Predicated region
      $region13: #{tpu_custom_call.1} parent=11 // pred_check
        %p123 = pneg %p82
      $region14: #{tpu_custom_call.1} parent=11 // pred_check_branch
        %125 = sbr.rel (%p123) target = $region16
      $region15: #{tpu_custom_call.1} parent=11 // pred_region
        _
      $region16: #{tpu_custom_call.1} parent=11 // pred_fallthru
        _
    $region12: #{tpu_custom_call.1} parent=5 // pred_fallthru
      _
    %p126 = scmp.lt.s32.totalorder %s9, 2
    // Predicated region
    $region17: #{tpu_custom_call.1} parent=5 // pred_check
      %p127 = pneg %p126
    $region18: #{tpu_custom_call.1} parent=5 // pred_check_branch
      %129 = sbr.rel (%p127) target = $region20
    $region19: #{tpu_custom_call.1} parent=5 // pred_region
      // Predicated region
      $region21: #{tpu_custom_call.1} parent=19 // pred_check
        %p130 = pneg %p29
      $region22: #{tpu_custom_call.1} parent=19 // pred_check_branch
        %132 = sbr.rel (%p130) target = $region24
      $region23: #{tpu_custom_call.1} parent=19 // pred_region
        %p133 = scmp.lt.s32.totalorder %s9, 1
        %s134 = scalar_select %p133, %s9, 1
        %s135 = smul.addr %s134, 8
        %s136 = scalar_lea.vmem %s0, %s135
      $region24: #{tpu_custom_call.1} parent=19 // pred_fallthru
        _
      // Predicated region
      $region25: #{tpu_custom_call.1} parent=19 // pred_check
        %p137 = pneg %p55
      $region26: #{tpu_custom_call.1} parent=19 // pred_check_branch
        %139 = sbr.rel (%p137) target = $region28
      $region27: #{tpu_custom_call.1} parent=19 // pred_region
        %p140 = scmp.lt.s32.totalorder %s9, 1
        %s141 = scalar_select %p140, %s9, 1
        %s142 = smul.addr %s141, 8
        %s143 = scalar_lea.vmem %s1, %s142
      $region28: #{tpu_custom_call.1} parent=19 // pred_fallthru
        _
    $region20: #{tpu_custom_call.1} parent=5 // pred_fallthru
      _
    %p144 = scmp.le.s32.totalorder 1, %s9
    %p145 = scmp.lt.s32.totalorder %s9, 3
    %p146 = pnand %p144, %p145
    %p147 = pneg %p146
    // Predicated region
    $region29: #{tpu_custom_call.1} parent=5 // pred_check
      _
    $region30: #{tpu_custom_call.1} parent=5 // pred_check_branch
      %149 = sbr.rel (%p146) target = $region32
    $region31: #{tpu_custom_call.1} parent=5 // pred_region
      %s150 = ssub.s32 %s9, 1
      %p151 = scmp.lt.s32.totalorder %s14, 1
      %s152 = scalar_select %p151, %s14, 1
      %s153 = smul.addr %s152, 8
      %s154 = scalar_lea.vmem %s0, %s153
      %p155 = pneg %p35
      %p156 = pneg %p32
      %p157 = scmp.lt.s32.totalorder %s14, 1
      %s158 = scalar_select %p157, %s14, 1
      %s159 = smul.addr %s158, 8
      %s160 = scalar_lea.vmem %s1, %s159
      %p161 = pneg %p61
      %p162 = pneg %p58
      %p163 = pneg %p82
      %p164 = pneg %p79
      %p165 = pneg %p108
      %p166 = pneg %p105
      %p167 = scmp.lt.s32.totalorder %s14, 1
      %s168 = scalar_select %p167, %s14, 1
      %s169 = smul.addr %s168, 8
      %s170 = scalar_lea.vmem %s3, %s169
      %p171 = scmp.lt.s32.totalorder %s14, 1
      %s172 = scalar_select %p171, %s14, 1
      %s173 = smul.addr %s172, 8
      %s174 = scalar_lea.vmem %s0, %s173
      %p175 = scmp.lt.s32.totalorder %s14, 1
      %s176 = scalar_select %p175, %s14, 1
      %s177 = smul.addr %s176, 8
      %s178 = scalar_lea.vmem %s1, %s177
      %p179 = scmp.lt.s32.totalorder %s14, 1
      %s180 = scalar_select %p179, %s14, 1
      %s181 = smul.addr %s180, 8
      %s182 = scalar_lea.vmem %s3, %s181
      %v183 = vld [vmem:[%s174] sm:$0xff]
      %v184 = vld [vmem:[%s2] sm:$0x3]
      %v185 = vperm.slane %v184, 0
      %v186 = vadd.f32 %v183, %v185
      %vm187 = vcmask 261120
      %v188 = vsel %vm187, %v186, -inf
      %189 = vmax.xlane.f32.xlu0 %v188
      %v190 = vpop.xlane.xlu0 %189
      %v191 = vsub.f32 %v186, %v190
      %v192 = vmul.f32 %v191, 1.442695
      %v193 = vpow.pop %v192
      %v194 = vsel %vm187, %v193, 0.0
      %195 = vadd.xlane.f32.xlu0 %v194
      %v196 = vpop.xlane.xlu0 %195
      %v197 = vld [vmem:[%s178] sm:$0xff]
      %199 = vset.pattern.permute.xlu0 0
      %200 = vperm.xlu0 %199, %v197
      %v201 = vpop.permute.xlu0 %200
      %v203 = vperm.slane %v184, 1
      %v204 = vsub.f32 %v201, %v203
      %v205 = vand.u32 2147483647, %v204
      %v206 = vmul.f32 %v193, %v205
      %v207 = vsel %vm187, %v206, 0.0
      %208 = vadd.xlane.f32.xlu0 %v207
      %v209 = vpop.xlane.xlu0 %208
      %v210 = vrcp.pop %v196
      %v211 = vmul.f32 %v196, %v210
      %v212 = vsub.f32 1.0, %v211
      %v213 = vmul.f32 %v210, %v212
      %v214 = vadd.f32 %v210, %v213
      %vm215 = vweird.f32 %v196
      %vm216 = vweird.f32 %v210
      %vm217 = vmor %vm215, %vm216
      %v218 = vsel %vm217, %v210, %v214
      %v219 = vand.u32 2147483647, %v196
      %vm220 = vcmp.eq.f32.partialorder %v219, 8.507059e+37
      %v221 = vand.u32 %v196, 2147483648
      %v222 = vor.u32 1.1754944e-38, %v221
      %v223 = vsel %vm220, %v222, %v218
      %v224 = vmul.f32 %v209, %v223
      %vm225 = vcmask 7168
      %226 = vst.msk [vmem:[%s182] sm:$0xff] %vm225, %v224
      %p227 = scmp.lt.s32.totalorder %s14, 1
      %s228 = scalar_select %p227, %s14, 1
      %s229 = smul.addr %s228, 8
      %s230 = scalar_lea.vmem %s3, %s229
      // Predicated region
      $region33: #{tpu_custom_call.1} parent=31 // pred_check
        %p231 = pneg %p105
      $region34: #{tpu_custom_call.1} parent=31 // pred_check_branch
        %233 = sbr.rel (%p231) target = $region36
      $region35: #{tpu_custom_call.1} parent=31 // pred_region
        _
      $region36: #{tpu_custom_call.1} parent=31 // pred_fallthru
        _
    $region32: #{tpu_custom_call.1} parent=5 // pred_fallthru
      _
    %p234 = scmp.le.s32.totalorder 2, %s9
    // Predicated region
    $region37: #{tpu_custom_call.1} parent=5 // pred_check
      %p235 = pneg %p234
    $region38: #{tpu_custom_call.1} parent=5 // pred_check_branch
      %237 = sbr.rel (%p235) target = $region40
    $region39: #{tpu_custom_call.1} parent=5 // pred_region
      %s238 = ssub.s32 %s9, 2
      // Predicated region
      $region41: #{tpu_custom_call.1} parent=39 // pred_check
        %p239 = pneg %p111
      $region42: #{tpu_custom_call.1} parent=39 // pred_check_branch
        %241 = sbr.rel (%p239) target = $region44
      $region43: #{tpu_custom_call.1} parent=39 // pred_region
        %p242 = scmp.lt.s32.totalorder %s15, 1
        %s243 = scalar_select %p242, %s15, 1
        %s244 = smul.addr %s243, 8
        %s245 = scalar_lea.vmem %s3, %s244
      $region44: #{tpu_custom_call.1} parent=39 // pred_fallthru
        _
    $region40: #{tpu_custom_call.1} parent=5 // pred_fallthru
      _
  $region6: #{tpu_custom_call.1} parent=0 // loop_footer
    %s13 = sadd.s32 1, %s9
  $region7: #{tpu_custom_call.1} parent=0 // loop_footer_branch
    %8 = sbr.rel target = $region3
  $region8: #{tpu_custom_call.1} parent=0 // loop_exit
    _

</llo_original>
